<compile_context>
chip_gen: v6e
topology: v6e:2x2x1
jax: 0.10.0
libtpu: 0.0.40
codegen_flags: <defaults>
</compile_context>

<pallas_src>
import functools

import jax
import jax.numpy as jnp
from jax.experimental import pallas as pl
from jax.experimental.pallas import tpu as pltpu


_LANE = 128
_SUBLANE = 8
_VMEM_TILE_BUDGET = 40 << 20   # per-step working-set budget (fits v7x 64 MiB VMEM)
_VMEM_LIMIT_BYTES = 48 << 20   # scoped-VMEM limit handed to the Mosaic compiler


def _encoder_kernel(xm_ref, xi_ref, wm_ref, wi_ref, b_ref, out_ref, mean_ref,
                    *, bn, t):
    """One (row-block, H-block) tile: fused concat + Linear + ReLU + mean.

    xm_ref:   (TM, Dm)   VMEM   (TM = BN * T rows)
    xi_ref:   (TM, Di)   VMEM
    wm_ref:   (Dm, TH)   VMEM
    wi_ref:   (Di, TH)   VMEM
    b_ref:    (1,  TH)   VMEM
    out_ref:  (TM, TH)   VMEM
    mean_ref: (BN, TH)   VMEM
    """
    # concat(x_m, x_i) @ concat(w_m, w_i) == x_m @ w_m + x_i @ w_i  (MXU, f32 acc)
    y = jnp.dot(xm_ref[...], wm_ref[...], preferred_element_type=jnp.float32)
    y = y + jnp.dot(xi_ref[...], wi_ref[...], preferred_element_type=jnp.float32)
    y = jnp.maximum(y + b_ref[...], 0.0)          # bias + ReLU (VPU)
    # Dropout: identity at eval time.
    out_ref[...] = y.astype(out_ref.dtype)

    th = y.shape[-1]
    # Per-batch-element mean over T (T contiguous rows per batch element).
    # TODO(synk): for very large T or T not a multiple of 8, a T grid axis with
    # a scratch accumulator would be preferable to this in-register split.
    y3 = y.reshape(bn, t, th)
    mean_ref[...] = (y3.sum(axis=1) * (1.0 / float(t))).astype(mean_ref.dtype)


def _round_up(x, m):
    return -(-x // m) * m


def _pick_tiles(n, t, h, dm, di, in_bytes, out_bytes, target_rows):
    """Choose (bn, th, pad): batch elems / H columns per block, padding fallback."""
    # --- H tile: a multiple of 128 that divides H (full H if not 128-aligned) ---
    th = h
    if h % _LANE == 0:
        for cand in (512, 384, 256, 128):
            if h % cand == 0:
                th = cand
                break

    # --- Row tile: BN batch elements (TM = BN*T rows), bounded by target_rows
    #     and by the VMEM working-set budget (double-buffered tiles). ---
    per_row = (2 * (_round_up(dm, _LANE) + _round_up(di, _LANE)) * in_bytes
               + 2 * th * out_bytes)
    fixed = (2 * (_round_up(dm, _SUBLANE) + _round_up(di, _SUBLANE) + _SUBLANE)
             * th * in_bytes)
    bn_cap = max(1, (_VMEM_TILE_BUDGET - fixed) // (per_row * max(t, 1)))
    max_bn = min(max(1, target_rows // max(t, 1)), bn_cap)

    divisors = [d for d in range(1, n + 1) if n % d == 0]
    valid = [d for d in divisors if d % _SUBLANE == 0 or d == n]
    fitting = [d for d in valid if d <= max_bn]
    if fitting:
        bn, pad = max(fitting), False        # exact divisor of N: no pad / no slice
    else:
        bn, pad = max(_SUBLANE, (max_bn // _SUBLANE) * _SUBLANE), True

    # v7x has 2 TensorCores: if the row grid is a single step, split H further
    # so both cores still receive "parallel" work.
    if -(-n // bn) == 1 and h % _LANE == 0 and h // th < 2:
        cands = [d for d in range(_LANE, h // 2 + 1, _LANE) if h % d == 0]
        if cands:
            th = max(cands)
    return bn, th, pad


def _encoder_pallas(feat_m, feat_i, w_m, w_i, b, *, target_rows=2048,
                    out_dtype=None):
    """feat_m (N,T,Dm), feat_i (N,T,Di), w_m (Dm,H), w_i (Di,H), b (1,H)
    -> (out (N,T,H), hidden (N,H))."""
    n, t, dm = feat_m.shape
    di = feat_i.shape[2]
    h = w_m.shape[1]
    out_dtype = feat_m.dtype if out_dtype is None else out_dtype
    in_bytes = jnp.dtype(feat_m.dtype).itemsize
    out_bytes = jnp.dtype(out_dtype).itemsize

    bn, th, pad = _pick_tiles(n, t, h, dm, di, in_bytes, out_bytes, target_rows)

    n_pad = _round_up(n, bn) if pad else n
    if n_pad != n:
        # Fallback only when no divisor of N satisfies the sublane-tiling rule.
        padcfg = ((0, n_pad - n), (0, 0), (0, 0))
        feat_m = jnp.pad(feat_m, padcfg)
        feat_i = jnp.pad(feat_i, padcfg)

    m = n_pad * t
    tm = bn * t

    # Free metadata reshapes: (N,T,D) -> (N*T, D) row slabs.
    xm = feat_m.reshape(m, dm)
    xi = feat_i.reshape(m, di)

    kernel = functools.partial(_encoder_kernel, bn=bn, t=t)

    grid = (n_pad // bn, h // th)
    grid_spec = pltpu.PrefetchScalarGridSpec(
        num_scalar_prefetch=0,
        grid=grid,
        in_specs=[
            pl.BlockSpec((tm, dm), lambda i, j: (i, 0)),
            pl.BlockSpec((tm, di), lambda i, j: (i, 0)),
            pl.BlockSpec((dm, th), lambda i, j: (0, j)),   # weight column block
            pl.BlockSpec((di, th), lambda i, j: (0, j)),   # weight column block
            pl.BlockSpec((1, th), lambda i, j: (0, j)),    # bias column block
        ],
        out_specs=[
            pl.BlockSpec((tm, th), lambda i, j: (i, j)),   # lane-dense (M, H) slab
            pl.BlockSpec((bn, th), lambda i, j: (i, j)),   # (N, H) means
        ],
    )

    flops = 2 * m * (dm + di) * h
    bytes_accessed = (m * (dm + di) * in_bytes
                      + (dm + di + 1) * h * in_bytes
                      + m * h * out_bytes
                      + n_pad * h * out_bytes)

    out2d, mean = pl.pallas_call(
        kernel,
        out_shape=(
            jax.ShapeDtypeStruct((m, h), out_dtype),
            jax.ShapeDtypeStruct((n_pad, h), out_dtype),
        ),
        grid_spec=grid_spec,
        compiler_params=pltpu.CompilerParams(
            dimension_semantics=("parallel", "parallel"),
            vmem_limit_bytes=_VMEM_LIMIT_BYTES,
        ),
        cost_estimate=pl.CostEstimate(
            flops=flops, transcendentals=0, bytes_accessed=bytes_accessed),
    )(xm, xi, w_m, w_i, b)

    out = out2d.reshape(n_pad, t, h)       # free metadata reshape
    hidden = mean
    if n_pad != n:
        out, hidden = out[:n], hidden[:n]
    return out, hidden


@jax.jit
def _encoder_forward(feat_m, feat_i, w, b):
    """Split the full Linear weight (Dm+Di, H) and run the fused kernel."""
    dm = feat_m.shape[2]
    w_m = w[:dm]
    w_i = w[dm:]
    return _encoder_pallas(feat_m, feat_i, w_m, w_i, b)


def init_multiple_streams_params(key, dim_m, dim_i, dim_hidden):
    """Deterministic parameter init mirroring MultipleStreams.__init__ shapes.

    Two encoders (modality 'mi'), each Linear(input_dim*2, dim_hidden).
    Only encoder 0 is used by the forward pass (as in the PyTorch code).
    """
    params = {"encoders": []}
    for d_in in (dim_m, dim_i):
        k_w, k_b, key = jax.random.split(key, 3)
        fan_in = d_in * 2
        limit = (6.0 / (fan_in + dim_hidden)) ** 0.5   # Xavier-uniform style
        w = jax.random.uniform(k_w, (fan_in, dim_hidden), jnp.float32, -limit, limit)
        b = jax.random.uniform(k_b, (1, dim_hidden), jnp.float32, -0.01, 0.01)
        params["encoders"].append({"w": w, "b": b})
    # SP(num_regions=5, dim=4096) is built in __init__ but never invoked by the
    # default forward; its parameters are omitted from the compute path.
    return params


def multiple_streams_forward(input_feats, params):
    """Pallas-backed forward of MultipleStreams (is_rnn=False, eval mode).

    input_feats: [feat_m (N,T,Dm), feat_i (N,T,Di)]
    Returns (encoder_outputs, encoder_hiddens) — lists of length 1, matching
    the PyTorch forward.
    """
    assert len(input_feats) == 2, "modality 'mi' expects two feature streams"
    enc = params["encoders"][0]                   # forward only uses encoders[0]
    out, hidden = _encoder_forward(input_feats[0], input_feats[1],
                                   enc["w"], enc["b"])
    return [out], [hidden]


def _reference_forward(input_feats, params):
    """Pure-JAX reference of the same forward, for correctness checking."""
    x = jnp.concatenate([input_feats[0], input_feats[1]], axis=2)
    enc = params["encoders"][0]
    y = jnp.maximum(jnp.einsum("ntd,dh->nth", x, enc["w"]) + enc["b"][None], 0.0)
    return [y], [y.mean(axis=1)]


def _run_case(key, n, t, dim_m, dim_i, dim_hidden):
    k_params, k_m, k_i = jax.random.split(key, 3)
    params = init_multiple_streams_params(k_params, dim_m, dim_i, dim_hidden)
    feat_m = jax.random.normal(k_m, (n, t, dim_m), jnp.float32)
    feat_i = jax.random.normal(k_i, (n, t, dim_i), jnp.float32)

    outs, hiddens = multiple_streams_forward([feat_m, feat_i], params)
    jax.block_until_ready(outs[0])
    jax.block_until_ready(hiddens[0])

    ref_outs, ref_hiddens = _reference_forward([feat_m, feat_i], params)
    assert outs[0].shape == (n, t, dim_hidden)
    assert hiddens[0].shape == (n, dim_hidden)
    assert jnp.allclose(outs[0], ref_outs[0], atol=1e-4, rtol=1e-4)
    assert jnp.allclose(hiddens[0], ref_hiddens[0], atol=1e-4, rtol=1e-4)


if __name__ == "__main__":
    key = jax.random.PRNGKey(0)
    k1, k2 = jax.random.split(key)

    # Case 1: module-consistent small shapes — opt = {modality:'mi', dim_m:16,
    # dim_i:16, dim_hidden:512}; encoder input dim = dim_m*2 = dim_m + dim_i.
    _run_case(k1, n=8, t=8, dim_m=16, dim_i=16, dim_hidden=512)

    # Case 2: awkward batch (N=6, not a multiple of 8) and H=384 — exercises
    # the divisor-of-N row tiling (no padding) and multi-block H tiling.
    _run_case(k2, n=6, t=16, dim_m=16, dim_i=16, dim_hidden=384)

    print("KERNEL_OK")
</pallas_src>

<mosaic_0001>
module attributes {stable_mosaic.version = 11 : i64} {
  func.func @_encoder_kernel(%arg0: i32, %arg1: i32, %arg2: memref<64x16xf32, #tpu.memory_space<vmem>>, %arg3: memref<64x16xf32, #tpu.memory_space<vmem>>, %arg4: memref<16x256xf32, #tpu.memory_space<vmem>>, %arg5: memref<16x256xf32, #tpu.memory_space<vmem>>, %arg6: memref<1x256xf32, #tpu.memory_space<vmem>>, %arg7: memref<64x256xf32, #tpu.memory_space<vmem>>, %arg8: memref<8x256xf32, #tpu.memory_space<vmem>>) attributes {dimension_semantics = [#tpu.dimension_semantics<parallel>, #tpu.dimension_semantics<parallel>], iteration_bounds = array<i64: 1, 2>, scalar_prefetch = 0 : i64, scratch_operands = 0 : i64, tpu.core_type = #tpu.core_type<tc>, window_params = [{transform_indices = @transform_0, window_bounds = array<i64: 64, 16>}, {transform_indices = @transform_1, window_bounds = array<i64: 64, 16>}, {transform_indices = @transform_2, window_bounds = array<i64: 16, 256>}, {transform_indices = @transform_3, window_bounds = array<i64: 16, 256>}, {transform_indices = @transform_4, window_bounds = array<i64: 1, 256>}, {transform_indices = @transform_5, window_bounds = array<i64: 64, 256>}, {transform_indices = @transform_6, window_bounds = array<i64: 8, 256>}]} {
    %c0 = arith.constant 0 : index
    %c0_0 = arith.constant 0 : index
    %0 = vector.load %arg2[%c0, %c0_0] : memref<64x16xf32, #tpu.memory_space<vmem>>, vector<64x16xf32>
    %c0_1 = arith.constant 0 : index
    %c0_2 = arith.constant 0 : index
    %1 = vector.load %arg4[%c0_1, %c0_2] : memref<16x256xf32, #tpu.memory_space<vmem>>, vector<16x256xf32>
    %cst = arith.constant dense<0.000000e+00> : vector<64x256xf32>
    %2 = tpu.matmul %0, %1, %cst {dimension_numbers = #tpu.dot_dimension_numbers<[1], [0], [0], [1], [0, 0, 1, 1], [], []>} : vector<64x16xf32>, vector<16x256xf32>, vector<64x256xf32> -> vector<64x256xf32>
    %c0_3 = arith.constant 0 : index
    %c0_4 = arith.constant 0 : index
    %3 = vector.load %arg3[%c0_3, %c0_4] : memref<64x16xf32, #tpu.memory_space<vmem>>, vector<64x16xf32>
    %c0_5 = arith.constant 0 : index
    %c0_6 = arith.constant 0 : index
    %4 = vector.load %arg5[%c0_5, %c0_6] : memref<16x256xf32, #tpu.memory_space<vmem>>, vector<16x256xf32>
    %cst_7 = arith.constant dense<0.000000e+00> : vector<64x256xf32>
    %5 = tpu.matmul %3, %4, %cst_7 {dimension_numbers = #tpu.dot_dimension_numbers<[1], [0], [0], [1], [0, 0, 1, 1], [], []>} : vector<64x16xf32>, vector<16x256xf32>, vector<64x256xf32> -> vector<64x256xf32>
    %6 = arith.addf %2, %5 : vector<64x256xf32>
    %c0_8 = arith.constant 0 : index
    %c0_9 = arith.constant 0 : index
    %7 = vector.load %arg6[%c0_8, %c0_9] : memref<1x256xf32, #tpu.memory_space<vmem>>, vector<1x256xf32>
    %8 = vector.broadcast %7 : vector<1x256xf32> to vector<64x256xf32>
    %9 = arith.addf %6, %8 : vector<64x256xf32>
    %cst_10 = arith.constant 0.000000e+00 : f32
    %10 = vector.broadcast %cst_10 : f32 to vector<64x256xf32>
    %11 = arith.maximumf %9, %10 : vector<64x256xf32>
    %c0_11 = arith.constant 0 : index
    %c0_12 = arith.constant 0 : index
    %12 = vector.load %arg7[%c0_11, %c0_12] : memref<64x256xf32, #tpu.memory_space<vmem>>, vector<64x256xf32>
    tpu.vector_store %arg7[%c0_11, %c0_12], %11 {strides = array<i32>} : memref<64x256xf32, #tpu.memory_space<vmem>>, vector<64x256xf32>,
    %13 = vector.shape_cast %11 : vector<64x256xf32> to vector<8x8x256xf32>
    %cst_13 = arith.constant dense<0.000000e+00> : vector<8x256xf32>
    %14 = vector.multi_reduction <add>, %13, %cst_13 [1] : vector<8x8x256xf32> to vector<8x256xf32>
    %cst_14 = arith.constant 1.250000e-01 : f32
    %15 = vector.broadcast %cst_14 : f32 to vector<8x256xf32>
    %16 = arith.mulf %14, %15 : vector<8x256xf32>
    %c0_15 = arith.constant 0 : index
    %c0_16 = arith.constant 0 : index
    %17 = vector.load %arg8[%c0_15, %c0_16] : memref<8x256xf32, #tpu.memory_space<vmem>>, vector<8x256xf32>
    tpu.vector_store %arg8[%c0_15, %c0_16], %16 {strides = array<i32>} : memref<8x256xf32, #tpu.memory_space<vmem>>, vector<8x256xf32>,
    return
  }
  func.func @transform_0(%arg0: i32, %arg1: i32) -> (i32, i32) {
    %c0_i32 = arith.constant 0 : i32
    %c0_i32_0 = arith.constant 0 : i32
    return %arg0, %c0_i32 : i32, i32
  }
  func.func @transform_1(%arg0: i32, %arg1: i32) -> (i32, i32) {
    %c0_i32 = arith.constant 0 : i32
    %c0_i32_0 = arith.constant 0 : i32
    return %arg0, %c0_i32 : i32, i32
  }
  func.func @transform_2(%arg0: i32, %arg1: i32) -> (i32, i32) {
    %c0_i32 = arith.constant 0 : i32
    %c0_i32_0 = arith.constant 0 : i32
    return %c0_i32, %arg1 : i32, i32
  }
  func.func @transform_3(%arg0: i32, %arg1: i32) -> (i32, i32) {
    %c0_i32 = arith.constant 0 : i32
    %c0_i32_0 = arith.constant 0 : i32
    return %c0_i32, %arg1 : i32, i32
  }
  func.func @transform_4(%arg0: i32, %arg1: i32) -> (i32, i32) {
    %c0_i32 = arith.constant 0 : i32
    %c0_i32_0 = arith.constant 0 : i32
    return %c0_i32, %arg1 : i32, i32
  }
  func.func @transform_5(%arg0: i32, %arg1: i32) -> (i32, i32) {
    %c0_i32 = arith.constant 0 : i32
    return %arg0, %arg1 : i32, i32
  }
  func.func @transform_6(%arg0: i32, %arg1: i32) -> (i32, i32) {
    %c0_i32 = arith.constant 0 : i32
    return %arg0, %arg1 : i32, i32
  }
}

</mosaic_0001>

<llo_original>
// kernel: _encoder_forward.1
$region0: #{_encoder_forward.1}
  #allocation0 [shape = 'u32[]', space=smem, size = 0x4, offset = 0x4, fixed_abs, tag = 'smem constant byte address 0x4 - core index']
  #allocation1 [shape = 'u32[144,128]{1,0:T(1,128)}', space=vmem, size = 0x12000, scoped, tag = 'internal scratch']
  %s0 = inlined_call_operand.vmem [shape: f32[64,16], index: 0, kind: input, shape index: {}]
  %s1 = inlined_call_operand.vmem [shape: f32[64,16], index: 1, kind: input, shape index: {}]
  %s2 = inlined_call_operand.vmem [shape: f32[16,512], index: 2, kind: input, shape index: {}]
  %s3 = inlined_call_operand.vmem [shape: f32[16,512], index: 3, kind: input, shape index: {}]
  %s4 = inlined_call_operand.vmem [shape: f32[1,512], index: 4, kind: input, shape index: {}]
  %s5 = inlined_call_operand.hbm [shape: f32[64,512], index: 5, kind: output, shape index: {0}]
  %s6 = inlined_call_operand.hbm [shape: f32[8,512], index: 6, kind: output, shape index: {1}]
  %7 = xla_tuple %s5, %s6
  %s8 = sld [smem:[#allocation0]]
  $region107: #{_encoder_forward.1} parent=0
    _
  %s10 = ssub.s32 1, %s8
  %s11 = scalar_select 0, %s10, %s8
  $region1: #{_encoder_forward.1} parent=0
    #allocation2 [shape = 'u8[32768]{0}', space=vmem, size = 0x8000, scoped, tag = 'input window, operand 2']
    #allocation3 [shape = 'u8[32768]{0}', space=vmem, size = 0x8000, scoped, tag = 'input window, operand 3']
    #allocation4 [shape = 'u8[131072]{0}', space=vmem, size = 0x20000, scoped, tag = 'output window, operand 0']
    #allocation5 [shape = 's32[2]{0}', space=sflag, size = 0x8, scoped, tag = 'scoped memory for _encoder_forward.1']
    #allocation6 [shape = 'u8[16384]{0}', space=vmem, size = 0x4000, scoped, tag = 'output window, operand 1']
    #allocation7 [shape = 's32[2]{0}', space=sflag, size = 0x8, scoped, tag = 'scoped memory for _encoder_forward.1']
    %12 = vsyncpa [#allocation5], 0
    %s13 = scalar_lea.sflag [#allocation5], 1
    %14 = vsyncpa %s13, 0
    %15 = vsyncpa [#allocation7], 0
    %s16 = scalar_lea.sflag [#allocation7], 1
    %17 = vsyncpa %s16, 0
    loop: start=0, step=1, limit=4
    $region2: #{_encoder_forward.1} parent=1 // loop_pre_header
      _
    $region3: #{_encoder_forward.1} parent=1 // loop_header
      %s19 = sphi 0, %s23
      %p20 = scmp.ge.s32.totalorder %s19, 4
      %s26 = sphi 0, %s38
      %s27 = sphi 0, %s34
      %s28 = sphi 0, %s26
      %s29 = sphi 0, %s27
      %s30 = sphi 0, %s28
      %s31 = sphi 0, %s29
      %s41 = sphi 0, %s43
      %s44 = sphi 0, %s41
      %s45 = sphi 0, %s44
      %s61 = sphi 0, %s45
      %s67 = sphi 0, %s69
      %s70 = sphi 0, %s67
      %s71 = sphi 0, %s70
      %s87 = sphi 0, %s71
      %s93 = sphi 0, %s95
      %s96 = sphi 0, %s93
      %s97 = sphi 0, %s96
      %s113 = sphi 0, %s97
      %s119 = sphi 0, %s121
      %s122 = sphi 0, %s119
      %s123 = sphi 0, %s122
      %s139 = sphi 0, %s123
      %s145 = sphi 0, %s147
      %s148 = sphi 0, %s145
      %s149 = sphi 0, %s148
      %s165 = sphi 0, %s149
      %s173 = sphi 0, %s175
      %s176 = sphi 0, %s173
      %s177 = sphi 0, %s176
      %s193 = sphi 0, %s177
      %s201 = sphi 0, %s203
      %s204 = sphi 0, %s201
      %s205 = sphi 0, %s204
      %s221 = sphi 0, %s205
    $region4: #{_encoder_forward.1} parent=1 // loop_header_branch
      %22 = sbr.rel (%p20) target = $region8
    $region5: #{_encoder_forward.1} parent=1 // loop_body
      %s24 = ssub.s32 %s19, 1
      %s25 = ssub.s32 %s19, 2
      %s32 = sadd.s32 1, %s27
      %p33 = scmp.ge.s32.totalorder %s32, 2
      %s34 = scalar_select %p33, 0, %s32
      %s35 = sadd.s32 1, %s26
      %s36 = scalar_select %p33, %s35, %s26
      %p37 = scmp.ge.s32.totalorder %s36, 1
      %s38 = scalar_select %p37, 0, %s36
      %s39 = ssub.s32 %s26, %s38
      %p40 = scmp.eq.s32.totalorder %s39, 0
      %s42 = sadd.s32 %s41, 1
      %s43 = scalar_select %p40, %s41, %s42
      %p46 = pneg %p40
      %p47 = scmp.eq.s32.totalorder %s19, 1
      %p48 = por %p46, %p47
      %p49 = scmp.ne.s32.totalorder %s41, %s44
      %p50 = scmp.eq.s32.totalorder %s19, 0
      %p51 = por %p49, %p50
      %p52 = scmp.ne.s32.totalorder %s41, %s44
      %p53 = scmp.eq.s32.totalorder %s24, 1
      %p54 = por %p52, %p53
      %p55 = scmp.ne.s32.totalorder %s44, %s45
      %p56 = scmp.eq.s32.totalorder %s24, 0
      %p57 = por %p55, %p56
      %p58 = scmp.ne.s32.totalorder %s44, %s45
      %p59 = scmp.eq.s32.totalorder %s25, 1
      %p60 = por %p58, %p59
      %p62 = scmp.ne.s32.totalorder %s45, %s61
      %p63 = scmp.eq.s32.totalorder %s25, 0
      %p64 = por %p62, %p63
      %s65 = ssub.s32 %s26, %s38
      %p66 = scmp.eq.s32.totalorder %s65, 0
      %s68 = sadd.s32 %s67, 1
      %s69 = scalar_select %p66, %s67, %s68
      %p72 = pneg %p66
      %p73 = scmp.eq.s32.totalorder %s19, 1
      %p74 = por %p72, %p73
      %p75 = scmp.ne.s32.totalorder %s67, %s70
      %p76 = scmp.eq.s32.totalorder %s19, 0
      %p77 = por %p75, %p76
      %p78 = scmp.ne.s32.totalorder %s67, %s70
      %p79 = scmp.eq.s32.totalorder %s24, 1
      %p80 = por %p78, %p79
      %p81 = scmp.ne.s32.totalorder %s70, %s71
      %p82 = scmp.eq.s32.totalorder %s24, 0
      %p83 = por %p81, %p82
      %p84 = scmp.ne.s32.totalorder %s70, %s71
      %p85 = scmp.eq.s32.totalorder %s25, 1
      %p86 = por %p84, %p85
      %p88 = scmp.ne.s32.totalorder %s71, %s87
      %p89 = scmp.eq.s32.totalorder %s25, 0
      %p90 = por %p88, %p89
      %s91 = ssub.s32 %s27, %s34
      %p92 = scmp.eq.s32.totalorder %s91, 0
      %s94 = sadd.s32 %s93, 1
      %s95 = scalar_select %p92, %s93, %s94
      %p98 = pneg %p92
      %p99 = scmp.eq.s32.totalorder %s19, 1
      %p100 = por %p98, %p99
      %p101 = scmp.ne.s32.totalorder %s93, %s96
      %p102 = scmp.eq.s32.totalorder %s19, 0
      %p103 = por %p101, %p102
      %p104 = scmp.ne.s32.totalorder %s93, %s96
      %p105 = scmp.eq.s32.totalorder %s24, 1
      %p106 = por %p104, %p105
      %p107 = scmp.ne.s32.totalorder %s96, %s97
      %p108 = scmp.eq.s32.totalorder %s24, 0
      %p109 = por %p107, %p108
      %p110 = scmp.ne.s32.totalorder %s96, %s97
      %p111 = scmp.eq.s32.totalorder %s25, 1
      %p112 = por %p110, %p111
      %p114 = scmp.ne.s32.totalorder %s97, %s113
      %p115 = scmp.eq.s32.totalorder %s25, 0
      %p116 = por %p114, %p115
      %s117 = ssub.s32 %s27, %s34
      %p118 = scmp.eq.s32.totalorder %s117, 0
      %s120 = sadd.s32 %s119, 1
      %s121 = scalar_select %p118, %s119, %s120
      %p124 = pneg %p118
      %p125 = scmp.eq.s32.totalorder %s19, 1
      %p126 = por %p124, %p125
      %p127 = scmp.ne.s32.totalorder %s119, %s122
      %p128 = scmp.eq.s32.totalorder %s19, 0
      %p129 = por %p127, %p128
      %p130 = scmp.ne.s32.totalorder %s119, %s122
      %p131 = scmp.eq.s32.totalorder %s24, 1
      %p132 = por %p130, %p131
      %p133 = scmp.ne.s32.totalorder %s122, %s123
      %p134 = scmp.eq.s32.totalorder %s24, 0
      %p135 = por %p133, %p134
      %p136 = scmp.ne.s32.totalorder %s122, %s123
      %p137 = scmp.eq.s32.totalorder %s25, 1
      %p138 = por %p136, %p137
      %p140 = scmp.ne.s32.totalorder %s123, %s139
      %p141 = scmp.eq.s32.totalorder %s25, 0
      %p142 = por %p140, %p141
      %s143 = ssub.s32 %s27, %s34
      %p144 = scmp.eq.s32.totalorder %s143, 0
      %s146 = sadd.s32 %s145, 1
      %s147 = scalar_select %p144, %s145, %s146
      %p150 = pneg %p144
      %p151 = scmp.eq.s32.totalorder %s19, 1
      %p152 = por %p150, %p151
      %p153 = scmp.ne.s32.totalorder %s145, %s148
      %p154 = scmp.eq.s32.totalorder %s19, 0
      %p155 = por %p153, %p154
      %p156 = scmp.ne.s32.totalorder %s145, %s148
      %p157 = scmp.eq.s32.totalorder %s24, 1
      %p158 = por %p156, %p157
      %p159 = scmp.ne.s32.totalorder %s148, %s149
      %p160 = scmp.eq.s32.totalorder %s24, 0
      %p161 = por %p159, %p160
      %p162 = scmp.ne.s32.totalorder %s148, %s149
      %p163 = scmp.eq.s32.totalorder %s25, 1
      %p164 = por %p162, %p163
      %p166 = scmp.ne.s32.totalorder %s149, %s165
      %p167 = scmp.eq.s32.totalorder %s25, 0
      %p168 = por %p166, %p167
      %s169 = ssub.s32 %s26, %s38
      %s170 = ssub.s32 %s27, %s34
      %s171 = sor.u32 %s169, %s170
      %p172 = scmp.eq.s32.totalorder %s171, 0
      %s174 = sadd.s32 %s173, 1
      %s175 = scalar_select %p172, %s173, %s174
      %p178 = pneg %p172
      %p179 = scmp.eq.s32.totalorder %s19, 1
      %p180 = por %p178, %p179
      %p181 = scmp.ne.s32.totalorder %s173, %s176
      %p182 = scmp.eq.s32.totalorder %s19, 0
      %p183 = por %p181, %p182
      %p184 = scmp.ne.s32.totalorder %s173, %s176
      %p185 = scmp.eq.s32.totalorder %s24, 1
      %p186 = por %p184, %p185
      %p187 = scmp.ne.s32.totalorder %s176, %s177
      %p188 = scmp.eq.s32.totalorder %s24, 0
      %p189 = por %p187, %p188
      %p190 = scmp.ne.s32.totalorder %s176, %s177
      %p191 = scmp.eq.s32.totalorder %s25, 1
      %p192 = por %p190, %p191
      %p194 = scmp.ne.s32.totalorder %s177, %s193
      %p195 = scmp.eq.s32.totalorder %s25, 0
      %p196 = por %p194, %p195
      %s197 = ssub.s32 %s26, %s38
      %s198 = ssub.s32 %s27, %s34
      %s199 = sor.u32 %s197, %s198
      %p200 = scmp.eq.s32.totalorder %s199, 0
      %s202 = sadd.s32 %s201, 1
      %s203 = scalar_select %p200, %s201, %s202
      %p206 = pneg %p200
      %p207 = scmp.eq.s32.totalorder %s19, 1
      %p208 = por %p206, %p207
      %p209 = scmp.ne.s32.totalorder %s201, %s204
      %p210 = scmp.eq.s32.totalorder %s19, 0
      %p211 = por %p209, %p210
      %p212 = scmp.ne.s32.totalorder %s201, %s204
      %p213 = scmp.eq.s32.totalorder %s24, 1
      %p214 = por %p212, %p213
      %p215 = scmp.ne.s32.totalorder %s204, %s205
      %p216 = scmp.eq.s32.totalorder %s24, 0
      %p217 = por %p215, %p216
      %p218 = scmp.ne.s32.totalorder %s204, %s205
      %p219 = scmp.eq.s32.totalorder %s25, 1
      %p220 = por %p218, %p219
      %p222 = scmp.ne.s32.totalorder %s205, %s221
      %p223 = scmp.eq.s32.totalorder %s25, 0
      %p224 = por %p222, %p223
      %p225 = scmp.le.s32.totalorder 1, %s19
      %p226 = scmp.lt.s32.totalorder %s19, 3
      %p227 = pnand %p225, %p226
      %p228 = pneg %p227
      // Predicated region
      $region9: #{_encoder_forward.1} parent=5 // pred_check
        _
      $region10: #{_encoder_forward.1} parent=5 // pred_check_branch
        %230 = sbr.rel (%p227) target = $region12
      $region11: #{_encoder_forward.1} parent=5 // pred_region
        %s231 = ssub.s32 %s19, 1
        // Predicated region
        $region13: #{_encoder_forward.1} parent=11 // pred_check
          %p232 = pneg %p57
        $region14: #{_encoder_forward.1} parent=11 // pred_check_branch
          %234 = sbr.rel (%p232) target = $region16
        $region15: #{_encoder_forward.1} parent=11 // pred_region
          %s235 = smul.u32 8, %s28
          %p236 = scmp.lt.s32.totalorder %s235, 7
          %s237 = scalar_select %p236, %s235, 7
          %s238 = smul.addr %s237, 8
          %s239 = scalar_lea.vmem %s0, %s238
          %s240 = smul.u32 8, %s28
        $region16: #{_encoder_forward.1} parent=11 // pred_fallthru
          _
        // Predicated region
        $region17: #{_encoder_forward.1} parent=11 // pred_check
          %p241 = pneg %p83
        $region18: #{_encoder_forward.1} parent=11 // pred_check_branch
          %243 = sbr.rel (%p241) target = $region20
        $region19: #{_encoder_forward.1} parent=11 // pred_region
          %s244 = smul.u32 8, %s28
          %p245 = scmp.lt.s32.totalorder %s244, 7
          %s246 = scalar_select %p245, %s244, 7
          %s247 = smul.addr %s246, 8
          %s248 = scalar_lea.vmem %s1, %s247
          %s249 = smul.u32 8, %s28
        $region20: #{_encoder_forward.1} parent=11 // pred_fallthru
          _
      $region12: #{_encoder_forward.1} parent=5 // pred_fallthru
        _
      %p250 = scmp.lt.s32.totalorder %s19, 2
      // Predicated region
      $region21: #{_encoder_forward.1} parent=5 // pred_check
        %p251 = pneg %p250
      $region22: #{_encoder_forward.1} parent=5 // pred_check_branch
        %253 = sbr.rel (%p251) target = $region24
      $region23: #{_encoder_forward.1} parent=5 // pred_region
        // Predicated region
        $region25: #{_encoder_forward.1} parent=23 // pred_check
          %p254 = pneg %p103
        $region26: #{_encoder_forward.1} parent=23 // pred_check_branch
          %256 = sbr.rel (%p254) target = $region28
        $region27: #{_encoder_forward.1} parent=23 // pred_region
          %s257 = sand.u32 %s93, 1
          %s258 = sand.u32 %s93, 1
          %s259 = smul.addr %s258, 32
          %s260 = scalar_lea.vmem [#allocation2], %s259
          %s261 = smul.u32 2, %s27
          %s262 = smul.addr %s261, 8
          %s263 = scalar_lea.vmem %s2, %s262
          // Predicated region
          $region29: #{_encoder_forward.1} parent=27 // pred_check
            _
          $region30: #{_encoder_forward.1} parent=27 // pred_check_branch
            %265 = sbr.rel (0) target = $region32
          $region31: #{_encoder_forward.1} parent=27 // pred_region
            // Predicated region
            $region33: #{_encoder_forward.1} parent=31 // pred_check
              _
            $region34: #{_encoder_forward.1} parent=31 // pred_check_branch
              %267 = sbr.rel (0) target = $region36
            $region35: #{_encoder_forward.1} parent=31 // pred_region
              loop: start=0, step=1, limit=1
              $region37: #{_encoder_forward.1} parent=35 // loop_pre_header
                _
              $region38: #{_encoder_forward.1} parent=35 // loop_header
                %s269 = sphi 0, %s273
                %p270 = scmp.ge.s32.totalorder %s269, 1
                %s274 = sphi %s263, %s263
                %s275 = sphi %s260, %s260
              $region39: #{_encoder_forward.1} parent=35 // loop_header_branch
                %272 = sbr.rel (%p270) target = $region43
              $region40: #{_encoder_forward.1} parent=35 // loop_body
                %v276 = vld [vmem:[%s274] sm:$0xff]
                %277 = vst [vmem:[%s275] sm:$0xff] %v276
                %v278 = vld [vmem:[%s274 + $0x8] sm:$0xff]
                %279 = vst [vmem:[%s275 + $0x8] sm:$0xff] %v278
                %v280 = vld [vmem:[%s274 + $0x20] sm:$0xff]
                %281 = vst [vmem:[%s275 + $0x10] sm:$0xff] %v280
                %v282 = vld [vmem:[%s274 + $0x28] sm:$0xff]
                %283 = vst [vmem:[%s275 + $0x18] sm:$0xff] %v282
              $region41: #{_encoder_forward.1} parent=35 // loop_footer
                %s273 = sadd.s32 1, %s269
              $region42: #{_encoder_forward.1} parent=35 // loop_footer_branch
                %268 = sbr.rel target = $region38
              $region43: #{_encoder_forward.1} parent=35 // loop_exit
                _
            $region36: #{_encoder_forward.1} parent=31 // pred_fallthru
              _
            // Predicated region
            $region44: #{_encoder_forward.1} parent=31 // pred_check
              _
            $region45: #{_encoder_forward.1} parent=31 // pred_check_branch
              %285 = sbr.rel target = $region47
            $region46: #{_encoder_forward.1} parent=31 // pred_region
              _
            $region47: #{_encoder_forward.1} parent=31 // pred_fallthru
              _
          $region32: #{_encoder_forward.1} parent=27 // pred_fallthru
            _
          %286 = vnop
        $region28: #{_encoder_forward.1} parent=23 // pred_fallthru
          _
        // Predicated region
        $region48: #{_encoder_forward.1} parent=23 // pred_check
          %p287 = pneg %p129
        $region49: #{_encoder_forward.1} parent=23 // pred_check_branch
          %289 = sbr.rel (%p287) target = $region51
        $region50: #{_encoder_forward.1} parent=23 // pred_region
          %s290 = sand.u32 %s119, 1
          %s291 = sand.u32 %s119, 1
          %s292 = smul.addr %s291, 32
          %s293 = scalar_lea.vmem [#allocation3], %s292
          %s294 = smul.u32 2, %s27
          %s295 = smul.addr %s294, 8
          %s296 = scalar_lea.vmem %s3, %s295
          // Predicated region
          $region52: #{_encoder_forward.1} parent=50 // pred_check
            _
          $region53: #{_encoder_forward.1} parent=50 // pred_check_branch
            %298 = sbr.rel (0) target = $region55
          $region54: #{_encoder_forward.1} parent=50 // pred_region
            // Predicated region
            $region56: #{_encoder_forward.1} parent=54 // pred_check
              _
            $region57: #{_encoder_forward.1} parent=54 // pred_check_branch
              %300 = sbr.rel (0) target = $region59
            $region58: #{_encoder_forward.1} parent=54 // pred_region
              loop: start=0, step=1, limit=1
              $region60: #{_encoder_forward.1} parent=58 // loop_pre_header
                _
              $region61: #{_encoder_forward.1} parent=58 // loop_header
                %s302 = sphi 0, %s306
                %p303 = scmp.ge.s32.totalorder %s302, 1
                %s307 = sphi %s296, %s296
                %s308 = sphi %s293, %s293
              $region62: #{_encoder_forward.1} parent=58 // loop_header_branch
                %305 = sbr.rel (%p303) target = $region66
              $region63: #{_encoder_forward.1} parent=58 // loop_body
                %v309 = vld [vmem:[%s307] sm:$0xff]
                %310 = vst [vmem:[%s308] sm:$0xff] %v309
                %v311 = vld [vmem:[%s307 + $0x8] sm:$0xff]
                %312 = vst [vmem:[%s308 + $0x8] sm:$0xff] %v311
                %v313 = vld [vmem:[%s307 + $0x20] sm:$0xff]
                %314 = vst [vmem:[%s308 + $0x10] sm:$0xff] %v313
                %v315 = vld [vmem:[%s307 + $0x28] sm:$0xff]
                %316 = vst [vmem:[%s308 + $0x18] sm:$0xff] %v315
              $region64: #{_encoder_forward.1} parent=58 // loop_footer
                %s306 = sadd.s32 1, %s302
              $region65: #{_encoder_forward.1} parent=58 // loop_footer_branch
                %301 = sbr.rel target = $region61
              $region66: #{_encoder_forward.1} parent=58 // loop_exit
                _
            $region59: #{_encoder_forward.1} parent=54 // pred_fallthru
              _
            // Predicated region
            $region67: #{_encoder_forward.1} parent=54 // pred_check
              _
            $region68: #{_encoder_forward.1} parent=54 // pred_check_branch
              %318 = sbr.rel target = $region70
            $region69: #{_encoder_forward.1} parent=54 // pred_region
              _
            $region70: #{_encoder_forward.1} parent=54 // pred_fallthru
              _
          $region55: #{_encoder_forward.1} parent=50 // pred_fallthru
            _
          %319 = vnop
        $region51: #{_encoder_forward.1} parent=23 // pred_fallthru
          _
        // Predicated region
        $region71: #{_encoder_forward.1} parent=23 // pred_check
          %p320 = pneg %p155
        $region72: #{_encoder_forward.1} parent=23 // pred_check_branch
          %322 = sbr.rel (%p320) target = $region74
        $region73: #{_encoder_forward.1} parent=23 // pred_region
          %s323 = smul.u32 2, %s27
          %p324 = scmp.lt.s32.totalorder %s323, 3
          %s325 = scalar_select %p324, %s323, 3
          %s326 = scalar_lea.vmem %s4, %s325
          %s327 = smul.u32 2, %s27
        $region74: #{_encoder_forward.1} parent=23 // pred_fallthru
          _
      $region24: #{_encoder_forward.1} parent=5 // pred_fallthru
        _
      %p328 = scmp.le.s32.totalorder 1, %s19
      %p329 = scmp.lt.s32.totalorder %s19, 3
      %p330 = pnand %p328, %p329
      %p331 = pneg %p330
      // Predicated region
      $region75: #{_encoder_forward.1} parent=5 // pred_check
        _
      $region76: #{_encoder_forward.1} parent=5 // pred_check_branch
        %333 = sbr.rel (%p330) target = $region78
      $region77: #{_encoder_forward.1} parent=5 // pred_region
        %s334 = ssub.s32 %s19, 1
        %s335 = sand.u32 %s96, 1
        %s336 = sand.u32 %s96, 1
        %s337 = smul.addr %s336, 32
        %s338 = scalar_lea.vmem [#allocation2], %s337
        // Predicated region
        $region79: #{_encoder_forward.1} parent=77 // pred_check
          %p339 = pneg %p109
        $region80: #{_encoder_forward.1} parent=77 // pred_check_branch
          %341 = sbr.rel (%p339) target = $region82
        $region81: #{_encoder_forward.1} parent=77 // pred_region
          _
        $region82: #{_encoder_forward.1} parent=77 // pred_fallthru
          _
        %s342 = sand.u32 %s122, 1
        %s343 = sand.u32 %s122, 1
        %s344 = smul.addr %s343, 32
        %s345 = scalar_lea.vmem [#allocation3], %s344
        // Predicated region
        $region83: #{_encoder_forward.1} parent=77 // pred_check
          %p346 = pneg %p135
        $region84: #{_encoder_forward.1} parent=77 // pred_check_branch
          %348 = sbr.rel (%p346) target = $region86
        $region85: #{_encoder_forward.1} parent=77 // pred_region
          _
        $region86: #{_encoder_forward.1} parent=77 // pred_fallthru
          _
        %s349 = smul.u32 8, %s28
        %p350 = scmp.lt.s32.totalorder %s349, 7
        %s351 = scalar_select %p350, %s349, 7
        %s352 = smul.addr %s351, 8
        %s353 = scalar_lea.vmem %s0, %s352
        %p354 = pneg %p57
        %p355 = pneg %p54
        %s356 = smul.u32 8, %s28
        %p357 = scmp.lt.s32.totalorder %s356, 7
        %s358 = scalar_select %p357, %s356, 7
        %s359 = smul.addr %s358, 8
        %s360 = scalar_lea.vmem %s1, %s359
        %p361 = pneg %p83
        %p362 = pneg %p80
        %s363 = sand.u32 %s96, 1
        %s364 = sand.u32 %s96, 1
        %s365 = smul.addr %s364, 32
        %s366 = scalar_lea.vmem [#allocation2], %s365
        %p367 = pneg %p109
        %p368 = pneg %p106
        %s369 = sand.u32 %s122, 1
        %s370 = sand.u32 %s122, 1
        %s371 = smul.addr %s370, 32
        %s372 = scalar_lea.vmem [#allocation3], %s371
        %p373 = pneg %p135
        %p374 = pneg %p132
        %s375 = smul.u32 2, %s29
        %p376 = scmp.lt.s32.totalorder %s375, 3
        %s377 = scalar_select %p376, %s375, 3
        %s378 = scalar_lea.vmem %s4, %s377
        %p379 = pneg %p161
        %p380 = pneg %p158
        %p381 = pneg %p189
        %p382 = pneg %p186
        %s383 = sand.u32 %s176, 1
        %s384 = scalar_lea.sflag [#allocation5], %s383
        %s385 = sand.u32 %s176, 1
        %s386 = smul.addr %s385, 128
        %s387 = scalar_lea.vmem [#allocation4], %s386
        %p388 = pneg %p217
        %p389 = pneg %p214
        %s390 = sand.u32 %s204, 1
        %s391 = scalar_lea.sflag [#allocation7], %s390
        %s392 = sand.u32 %s204, 1
        %s393 = smul.addr %s392, 16
        %s394 = scalar_lea.vmem [#allocation6], %s393
        %s395 = smul.u32 8, %s28
        %p396 = scmp.lt.s32.totalorder %s395, 7
        %s397 = scalar_select %p396, %s395, 7
        %s398 = smul.addr %s397, 8
        %s399 = scalar_lea.vmem %s0, %s398
        %s400 = smul.u32 8, %s28
        %s401 = smul.u32 8, %s28
        %p402 = scmp.lt.s32.totalorder %s401, 7
        %s403 = scalar_select %p402, %s401, 7
        %s404 = smul.addr %s403, 8
        %s405 = scalar_lea.vmem %s1, %s404
        %s406 = smul.u32 8, %s28
        %s407 = smul.u32 2, %s29
        %s408 = smul.u32 2, %s29
        %s409 = smul.u32 2, %s29
        %p410 = scmp.lt.s32.totalorder %s409, 3
        %s411 = scalar_select %p410, %s409, 3
        %s412 = scalar_lea.vmem %s4, %s411
        %s413 = smul.u32 2, %s29
        %s414 = smul.u32 8, %s28
        %s415 = smul.u32 2, %s29
        %s416 = smul.u32 2, %s29
        %v417 = vld [vmem:[%s399] sm:$0xff]
        %v418 = vld [vmem:[%s399 + $0x8] sm:$0xff]
        %v419 = vld [vmem:[%s399 + $0x10] sm:$0xff]
        %v420 = vld [vmem:[%s399 + $0x18] sm:$0xff]
        %v421 = vld [vmem:[%s399 + $0x20] sm:$0xff]
        %v422 = vld [vmem:[%s399 + $0x28] sm:$0xff]
        %v423 = vld [vmem:[%s399 + $0x30] sm:$0xff]
        %v424 = vld [vmem:[%s399 + $0x38] sm:$0xff]
        %v425 = vld [vmem:[%s338] sm:$0xff]
        %v426 = vld [vmem:[%s338 + $0x8] sm:$0xff]
        %v427 = vld [vmem:[%s338 + $0x10] sm:$0xff]
        %v428 = vld [vmem:[%s338 + $0x18] sm:$0xff]
        %v429 = vld [vmem:[%s405] sm:$0xff]
        %v430 = vld [vmem:[%s405 + $0x8] sm:$0xff]
        %v431 = vld [vmem:[%s405 + $0x10] sm:$0xff]
        %v432 = vld [vmem:[%s405 + $0x18] sm:$0xff]
        %v433 = vld [vmem:[%s405 + $0x20] sm:$0xff]
        %v434 = vld [vmem:[%s405 + $0x28] sm:$0xff]
        %v435 = vld [vmem:[%s405 + $0x30] sm:$0xff]
        %v436 = vld [vmem:[%s405 + $0x38] sm:$0xff]
        %v437 = vld [vmem:[%s345] sm:$0xff]
        %v438 = vld [vmem:[%s345 + $0x8] sm:$0xff]
        %v439 = vld [vmem:[%s345 + $0x10] sm:$0xff]
        %v440 = vld [vmem:[%s345 + $0x18] sm:$0xff]
        %vm441 = vcmask 130048
        %v443 = vsel %vm441, %v429, 0
        %v446 = vsel %vm441, %v430, 0
        %v449 = vsel %vm441, %v431, 0
        %v452 = vsel %vm441, %v432, 0
        %v455 = vsel %vm441, %v433, 0
        %v458 = vsel %vm441, %v434, 0
        %v461 = vsel %vm441, %v435, 0
        %v464 = vsel %vm441, %v436, 0
        %466 = vmatprep.subr.mxu0 0.0
        %467 = vmatpush1.msra.mxu0 0.0
        %468 = vmatprep.subr.mxu0 0.0
        %469 = vmatpush1.msra.mxu0 0.0
        %470 = vmatprep.subr.mxu0 0.0
        %471 = vmatpush1.msra.mxu0 0.0
        %472 = vmatprep.subr.mxu0 0.0
        %473 = vmatpush1.msra.mxu0 0.0
        %474 = vmatprep.subr.mxu0 0.0
        %475 = vmatpush1.msra.mxu0 0.0
        %476 = vmatprep.subr.mxu0 0.0
        %477 = vmatpush1.msra.mxu0 0.0
        %478 = vmatprep.subr.mxu0 0.0
        %479 = vmatpush1.msra.mxu0 0.0
        %480 = vmatprep.subr.mxu0 0.0
        %481 = vmatpush1.msra.mxu0 0.0
        %482 = vmatprep.subr.mxu0 0.0
        %483 = vmatpush1.msra.mxu0 0.0
        %484 = vmatprep.subr.mxu0 0.0
        %485 = vmatpush1.msra.mxu0 0.0
        %486 = vmatprep.subr.mxu0 0.0
        %487 = vmatpush1.msra.mxu0 0.0
        %488 = vmatprep.subr.mxu0 0.0
        %489 = vmatpush1.msra.mxu0 0.0
        %490 = vmatprep.subr.mxu0 0.0
        %491 = vmatpush1.msra.mxu0 0.0
        %492 = vmatprep.subr.mxu0 0.0
        %493 = vmatpush1.msra.mxu0 0.0
        %494 = vmatprep.subr.mxu0 %v440
        %495 = vmatpush1.msra.mxu0 %v439
        %496 = vmatprep.subr.mxu0 %v438
        %497 = vmatpush1.msra.mxu0 %v437
        %498 = vmatprep.subr.mxu0 0.0
        %499 = vmatpush2.msra.mxu0 0.0
        %500 = vmatprep.subr.mxu0 0.0
        %501 = vmatpush2.msra.mxu0 0.0
        %502 = vmatprep.subr.mxu0 0.0
        %503 = vmatpush2.msra.mxu0 0.0
        %504 = vmatprep.subr.mxu0 0.0
        %505 = vmatpush2.msra.mxu0 0.0
        %506 = vmatprep.subr.mxu0 0.0
        %507 = vmatpush2.msra.mxu0 0.0
        %508 = vmatprep.subr.mxu0 0.0
        %509 = vmatpush2.msra.mxu0 0.0
        %510 = vmatprep.subr.mxu0 0.0
        %511 = vmatpush2.msra.mxu0 0.0
        %512 = vmatprep.subr.mxu0 0.0
        %513 = vmatpush2.msra.mxu0 0.0
        %514 = vmatprep.subr.mxu0 0.0
        %515 = vmatpush2.msra.mxu0 0.0
        %516 = vmatprep.subr.mxu0 0.0
        %517 = vmatpush2.msra.mxu0 0.0
        %518 = vmatprep.subr.mxu0 0.0
        %519 = vmatpush2.msra.mxu0 0.0
        %520 = vmatprep.subr.mxu0 0.0
        %521 = vmatpush2.msra.mxu0 0.0
        %522 = vmatprep.subr.mxu0 0.0
        %523 = vmatpush2.msra.mxu0 0.0
        %524 = vmatprep.subr.mxu0 0.0
        %525 = vmatpush2.msra.mxu0 0.0
        %526 = vmatprep.subr.mxu0 0.0
        %527 = vmatpush2.msra.mxu0 0.0
        %528 = vmatprep.subr.mxu0 0.0
        %529 = vmatpush2.msra.mxu0 0.0
        %530 = vmatprep.mubr.f32.mxu0 0.0
        %531 = vmatmul.mubr.f32.gmra.mxu0 %v443
        %v532 = vpop.f32.mrf.mxu0
        %v533 = vadd.f32 0.0, %v532
        %v534 = vpop.f32.mrf.mxu0
        %v535 = vadd.f32 0.0, %v534
        %536 = vmatprep.mubr.f32.mxu0 0.0
        %537 = vmatmul.mubr.f32.gmra.mxu0 %v446
        %v538 = vpop.f32.mrf.mxu0
        %v539 = vadd.f32 0.0, %v538
        %v540 = vpop.f32.mrf.mxu0
        %v541 = vadd.f32 0.0, %v540
        %542 = vmatprep.mubr.f32.mxu0 0.0
        %543 = vmatmul.mubr.f32.gmra.mxu0 %v449
        %v544 = vpop.f32.mrf.mxu0
        %v545 = vadd.f32 0.0, %v544
        %v546 = vpop.f32.mrf.mxu0
        %v547 = vadd.f32 0.0, %v546
        %548 = vmatprep.mubr.f32.mxu0 0.0
        %549 = vmatmul.mubr.f32.gmra.mxu0 %v452
        %v550 = vpop.f32.mrf.mxu0
        %v551 = vadd.f32 0.0, %v550
        %v552 = vpop.f32.mrf.mxu0
        %v553 = vadd.f32 0.0, %v552
        %554 = vmatprep.mubr.f32.mxu0 0.0
        %555 = vmatmul.mubr.f32.gmra.mxu0 %v455
        %v556 = vpop.f32.mrf.mxu0
        %v557 = vadd.f32 0.0, %v556
        %v558 = vpop.f32.mrf.mxu0
        %v559 = vadd.f32 0.0, %v558
        %560 = vmatprep.mubr.f32.mxu0 0.0
        %561 = vmatmul.mubr.f32.gmra.mxu0 %v458
        %v562 = vpop.f32.mrf.mxu0
        %v563 = vadd.f32 0.0, %v562
        %v564 = vpop.f32.mrf.mxu0
        %v565 = vadd.f32 0.0, %v564
        %566 = vmatprep.mubr.f32.mxu0 0.0
        %567 = vmatmul.mubr.f32.gmra.mxu0 %v461
        %v568 = vpop.f32.mrf.mxu0
        %v569 = vadd.f32 0.0, %v568
        %v570 = vpop.f32.mrf.mxu0
        %v571 = vadd.f32 0.0, %v570
        %572 = vmatprep.mubr.f32.mxu0 0.0
        %573 = vmatmul.mubr.f32.gmra.mxu0 %v464
        %v574 = vpop.f32.mrf.mxu0
        %v575 = vadd.f32 0.0, %v574
        %v576 = vpop.f32.mrf.mxu0
        %v577 = vadd.f32 0.0, %v576
        %578 = vdwg.mxu0
        %v580 = vsel %vm441, %v417, 0
        %v583 = vsel %vm441, %v418, 0
        %v586 = vsel %vm441, %v419, 0
        %v589 = vsel %vm441, %v420, 0
        %v592 = vsel %vm441, %v421, 0
        %v595 = vsel %vm441, %v422, 0
        %v598 = vsel %vm441, %v423, 0
        %v601 = vsel %vm441, %v424, 0
        %603 = vmatprep.subr.mxu0 0.0
        %604 = vmatpush1.msra.mxu0 0.0
        %605 = vmatprep.subr.mxu0 0.0
        %606 = vmatpush1.msra.mxu0 0.0
        %607 = vmatprep.subr.mxu0 0.0
        %608 = vmatpush1.msra.mxu0 0.0
        %609 = vmatprep.subr.mxu0 0.0
        %610 = vmatpush1.msra.mxu0 0.0
        %611 = vmatprep.subr.mxu0 0.0
        %612 = vmatpush1.msra.mxu0 0.0
        %613 = vmatprep.subr.mxu0 0.0
        %614 = vmatpush1.msra.mxu0 0.0
        %615 = vmatprep.subr.mxu0 0.0
        %616 = vmatpush1.msra.mxu0 0.0
        %617 = vmatprep.subr.mxu0 0.0
        %618 = vmatpush1.msra.mxu0 0.0
        %619 = vmatprep.subr.mxu0 0.0
        %620 = vmatpush1.msra.mxu0 0.0
        %621 = vmatprep.subr.mxu0 0.0
        %622 = vmatpush1.msra.mxu0 0.0
        %623 = vmatprep.subr.mxu0 0.0
        %624 = vmatpush1.msra.mxu0 0.0
        %625 = vmatprep.subr.mxu0 0.0
        %626 = vmatpush1.msra.mxu0 0.0
        %627 = vmatprep.subr.mxu0 0.0
        %628 = vmatpush1.msra.mxu0 0.0
        %629 = vmatprep.subr.mxu0 0.0
        %630 = vmatpush1.msra.mxu0 0.0
        %631 = vmatprep.subr.mxu0 %v428
        %632 = vmatpush1.msra.mxu0 %v427
        %633 = vmatprep.subr.mxu0 %v426
        %634 = vmatpush1.msra.mxu0 %v425
        %635 = vmatprep.subr.mxu0 0.0
        %636 = vmatpush2.msra.mxu0 0.0
        %637 = vmatprep.subr.mxu0 0.0
        %638 = vmatpush2.msra.mxu0 0.0
        %639 = vmatprep.subr.mxu0 0.0
        %640 = vmatpush2.msra.mxu0 0.0
        %641 = vmatprep.subr.mxu0 0.0
        %642 = vmatpush2.msra.mxu0 0.0
        %643 = vmatprep.subr.mxu0 0.0
        %644 = vmatpush2.msra.mxu0 0.0
        %645 = vmatprep.subr.mxu0 0.0
        %646 = vmatpush2.msra.mxu0 0.0
        %647 = vmatprep.subr.mxu0 0.0
        %648 = vmatpush2.msra.mxu0 0.0
        %649 = vmatprep.subr.mxu0 0.0
        %650 = vmatpush2.msra.mxu0 0.0
        %651 = vmatprep.subr.mxu0 0.0
        %652 = vmatpush2.msra.mxu0 0.0
        %653 = vmatprep.subr.mxu0 0.0
        %654 = vmatpush2.msra.mxu0 0.0
        %655 = vmatprep.subr.mxu0 0.0
        %656 = vmatpush2.msra.mxu0 0.0
        %657 = vmatprep.subr.mxu0 0.0
        %658 = vmatpush2.msra.mxu0 0.0
        %659 = vmatprep.subr.mxu0 0.0
        %660 = vmatpush2.msra.mxu0 0.0
        %661 = vmatprep.subr.mxu0 0.0
        %662 = vmatpush2.msra.mxu0 0.0
        %663 = vmatprep.subr.mxu0 0.0
        %664 = vmatpush2.msra.mxu0 0.0
        %665 = vmatprep.subr.mxu0 0.0
        %666 = vmatpush2.msra.mxu0 0.0
        %667 = vmatprep.mubr.f32.mxu0 0.0
        %668 = vmatmul.mubr.f32.gmra.mxu0 %v580
        %v669 = vpop.f32.mrf.mxu0
        %v670 = vadd.f32 %v533, %v669
        %v671 = vpop.f32.mrf.mxu0
        %v672 = vadd.f32 %v535, %v671
        %673 = vmatprep.mubr.f32.mxu0 0.0
        %674 = vmatmul.mubr.f32.gmra.mxu0 %v583
        %v675 = vpop.f32.mrf.mxu0
        %v676 = vadd.f32 %v539, %v675
        %v677 = vpop.f32.mrf.mxu0
        %v678 = vadd.f32 %v541, %v677
        %679 = vmatprep.mubr.f32.mxu0 0.0
        %680 = vmatmul.mubr.f32.gmra.mxu0 %v586
        %v681 = vpop.f32.mrf.mxu0
        %v682 = vadd.f32 %v545, %v681
        %v683 = vpop.f32.mrf.mxu0
        %v684 = vadd.f32 %v547, %v683
        %685 = vmatprep.mubr.f32.mxu0 0.0
        %686 = vmatmul.mubr.f32.gmra.mxu0 %v589
        %v687 = vpop.f32.mrf.mxu0
        %v688 = vadd.f32 %v551, %v687
        %v689 = vpop.f32.mrf.mxu0
        %v690 = vadd.f32 %v553, %v689
        %691 = vmatprep.mubr.f32.mxu0 0.0
        %692 = vmatmul.mubr.f32.gmra.mxu0 %v592
        %v693 = vpop.f32.mrf.mxu0
        %v694 = vadd.f32 %v557, %v693
        %v695 = vpop.f32.mrf.mxu0
        %v696 = vadd.f32 %v559, %v695
        %697 = vmatprep.mubr.f32.mxu0 0.0
        %698 = vmatmul.mubr.f32.gmra.mxu0 %v595
        %v699 = vpop.f32.mrf.mxu0
        %v700 = vadd.f32 %v563, %v699
        %v701 = vpop.f32.mrf.mxu0
        %v702 = vadd.f32 %v565, %v701
        %703 = vmatprep.mubr.f32.mxu0 0.0
        %704 = vmatmul.mubr.f32.gmra.mxu0 %v598
        %v705 = vpop.f32.mrf.mxu0
        %v706 = vadd.f32 %v569, %v705
        %v707 = vpop.f32.mrf.mxu0
        %v708 = vadd.f32 %v571, %v707
        %709 = vmatprep.mubr.f32.mxu0 0.0
        %710 = vmatmul.mubr.f32.gmra.mxu0 %v601
        %v711 = vpop.f32.mrf.mxu0
        %v712 = vadd.f32 %v575, %v711
        %v713 = vpop.f32.mrf.mxu0
        %v714 = vadd.f32 %v577, %v713
        %715 = vdwg.mxu0
        %v716 = vld [vmem:[%s412] sm:$0x3]
        %v718 = vlaneseq
        %v719 = vshrl.u32 %v718, 7
        %v720 = vsub.s32 0, %v719
        %v721 = vrot.slane %v716, %v720
        %v722 = vlaneseq
        %v723 = vshrl.u32 %v722, 7
        %v724 = vsub.s32 1, %v723
        %v725 = vrot.slane %v716, %v724
        %v728 = vadd.f32 %v670, %v721
        %v729 = vadd.f32 %v672, %v725
        %v730 = vadd.f32 %v676, %v721
        %v731 = vadd.f32 %v678, %v725
        %v732 = vadd.f32 %v682, %v721
        %v733 = vadd.f32 %v684, %v725
        %v734 = vadd.f32 %v688, %v721
        %v735 = vadd.f32 %v690, %v725
        %v736 = vadd.f32 %v694, %v721
        %v737 = vadd.f32 %v696, %v725
        %v738 = vadd.f32 %v700, %v721
        %v739 = vadd.f32 %v702, %v725
        %v740 = vadd.f32 %v706, %v721
        %v741 = vadd.f32 %v708, %v725
        %v742 = vadd.f32 %v712, %v721
        %v743 = vadd.f32 %v714, %v725
        %v744 = vmax.f32 %v728, 0.0
        %v745 = vmax.f32 %v729, 0.0
        %v746 = vmax.f32 %v730, 0.0
        %v747 = vmax.f32 %v731, 0.0
        %v748 = vmax.f32 %v732, 0.0
        %v749 = vmax.f32 %v733, 0.0
        %v750 = vmax.f32 %v734, 0.0
        %v751 = vmax.f32 %v735, 0.0
        %v752 = vmax.f32 %v736, 0.0
        %v753 = vmax.f32 %v737, 0.0
        %v754 = vmax.f32 %v738, 0.0
        %v755 = vmax.f32 %v739, 0.0
        %v756 = vmax.f32 %v740, 0.0
        %v757 = vmax.f32 %v741, 0.0
        %v758 = vmax.f32 %v742, 0.0
        %v759 = vmax.f32 %v743, 0.0
        %760 = vst [vmem:[%s387] sm:$0xff] %v744
        %761 = vst [vmem:[%s387 + $0x8] sm:$0xff] %v745
        %762 = vst [vmem:[%s387 + $0x10] sm:$0xff] %v746
        %763 = vst [vmem:[%s387 + $0x18] sm:$0xff] %v747
        %764 = vst [vmem:[%s387 + $0x20] sm:$0xff] %v748
        %765 = vst [vmem:[%s387 + $0x28] sm:$0xff] %v749
        %766 = vst [vmem:[%s387 + $0x30] sm:$0xff] %v750
        %767 = vst [vmem:[%s387 + $0x38] sm:$0xff] %v751
        %768 = vst [vmem:[%s387 + $0x40] sm:$0xff] %v752
        %769 = vst [vmem:[%s387 + $0x48] sm:$0xff] %v753
        %770 = vst [vmem:[%s387 + $0x50] sm:$0xff] %v754
        %771 = vst [vmem:[%s387 + $0x58] sm:$0xff] %v755
        %772 = vst [vmem:[%s387 + $0x60] sm:$0xff] %v756
        %773 = vst [vmem:[%s387 + $0x68] sm:$0xff] %v757
        %774 = vst [vmem:[%s387 + $0x70] sm:$0xff] %v758
        %775 = vst [vmem:[%s387 + $0x78] sm:$0xff] %v759
        %v776 = vrot.slane %v744, 4
        %v777 = vadd.f32 %v744, %v776
        %v778 = vrot.slane %v777, 2
        %v779 = vadd.f32 %v777, %v778
        %v780 = vrot.slane %v779, 1
        %v781 = vadd.f32 %v779, %v780
        %v782 = vrot.slane %v745, 4
        %v783 = vadd.f32 %v745, %v782
        %v784 = vrot.slane %v783, 2
        %v785 = vadd.f32 %v783, %v784
        %v786 = vrot.slane %v785, 1
        %v787 = vadd.f32 %v785, %v786
        %v788 = vrot.slane %v746, 4
        %v789 = vadd.f32 %v746, %v788
        %v790 = vrot.slane %v789, 2
        %v791 = vadd.f32 %v789, %v790
        %v792 = vrot.slane %v791, 1
        %v793 = vadd.f32 %v791, %v792
        %v794 = vrot.slane %v747, 4
        %v795 = vadd.f32 %v747, %v794
        %v796 = vrot.slane %v795, 2
        %v797 = vadd.f32 %v795, %v796
        %v798 = vrot.slane %v797, 1
        %v799 = vadd.f32 %v797, %v798
        %v800 = vrot.slane %v748, 4
        %v801 = vadd.f32 %v748, %v800
        %v802 = vrot.slane %v801, 2
        %v803 = vadd.f32 %v801, %v802
        %v804 = vrot.slane %v803, 1
        %v805 = vadd.f32 %v803, %v804
        %v806 = vrot.slane %v749, 4
        %v807 = vadd.f32 %v749, %v806
        %v808 = vrot.slane %v807, 2
        %v809 = vadd.f32 %v807, %v808
        %v810 = vrot.slane %v809, 1
        %v811 = vadd.f32 %v809, %v810
        %v812 = vrot.slane %v750, 4
        %v813 = vadd.f32 %v750, %v812
        %v814 = vrot.slane %v813, 2
        %v815 = vadd.f32 %v813, %v814
        %v816 = vrot.slane %v815, 1
        %v817 = vadd.f32 %v815, %v816
        %v818 = vrot.slane %v751, 4
        %v819 = vadd.f32 %v751, %v818
        %v820 = vrot.slane %v819, 2
        %v821 = vadd.f32 %v819, %v820
        %v822 = vrot.slane %v821, 1
        %v823 = vadd.f32 %v821, %v822
        %v824 = vrot.slane %v752, 4
        %v825 = vadd.f32 %v752, %v824
        %v826 = vrot.slane %v825, 2
        %v827 = vadd.f32 %v825, %v826
        %v828 = vrot.slane %v827, 1
        %v829 = vadd.f32 %v827, %v828
        %v830 = vrot.slane %v753, 4
        %v831 = vadd.f32 %v753, %v830
        %v832 = vrot.slane %v831, 2
        %v833 = vadd.f32 %v831, %v832
        %v834 = vrot.slane %v833, 1
        %v835 = vadd.f32 %v833, %v834
        %v836 = vrot.slane %v754, 4
        %v837 = vadd.f32 %v754, %v836
        %v838 = vrot.slane %v837, 2
        %v839 = vadd.f32 %v837, %v838
        %v840 = vrot.slane %v839, 1
        %v841 = vadd.f32 %v839, %v840
        %v842 = vrot.slane %v755, 4
        %v843 = vadd.f32 %v755, %v842
        %v844 = vrot.slane %v843, 2
        %v845 = vadd.f32 %v843, %v844
        %v846 = vrot.slane %v845, 1
        %v847 = vadd.f32 %v845, %v846
        %v848 = vrot.slane %v756, 4
        %v849 = vadd.f32 %v756, %v848
        %v850 = vrot.slane %v849, 2
        %v851 = vadd.f32 %v849, %v850
        %v852 = vrot.slane %v851, 1
        %v853 = vadd.f32 %v851, %v852
        %v854 = vrot.slane %v757, 4
        %v855 = vadd.f32 %v757, %v854
        %v856 = vrot.slane %v855, 2
        %v857 = vadd.f32 %v855, %v856
        %v858 = vrot.slane %v857, 1
        %v859 = vadd.f32 %v857, %v858
        %v860 = vrot.slane %v758, 4
        %v861 = vadd.f32 %v758, %v860
        %v862 = vrot.slane %v861, 2
        %v863 = vadd.f32 %v861, %v862
        %v864 = vrot.slane %v863, 1
        %v865 = vadd.f32 %v863, %v864
        %v866 = vrot.slane %v759, 4
        %v867 = vadd.f32 %v759, %v866
        %v868 = vrot.slane %v867, 2
        %v869 = vadd.f32 %v867, %v868
        %v870 = vrot.slane %v869, 1
        %v871 = vadd.f32 %v869, %v870
        %v872 = vmul.f32 %v781, 0.125
        %v873 = vmul.f32 %v787, 0.125
        %v874 = vmul.f32 %v793, 0.125
        %v875 = vmul.f32 %v799, 0.125
        %v876 = vmul.f32 %v805, 0.125
        %v877 = vmul.f32 %v811, 0.125
        %v878 = vmul.f32 %v817, 0.125
        %v879 = vmul.f32 %v823, 0.125
        %v880 = vmul.f32 %v829, 0.125
        %v881 = vmul.f32 %v835, 0.125
        %v882 = vmul.f32 %v841, 0.125
        %v883 = vmul.f32 %v847, 0.125
        %v884 = vmul.f32 %v853, 0.125
        %v885 = vmul.f32 %v859, 0.125
        %v886 = vmul.f32 %v865, 0.125
        %v887 = vmul.f32 %v871, 0.125
        %vm904 = vcmask 1041409
        %v905 = vsel %vm904, %v874, %v872
        %vm906 = vcmask 1042434
        %v907 = vsel %vm906, %v876, %v905
        %vm908 = vcmask 1043459
        %v909 = vsel %vm908, %v878, %v907
        %vm910 = vcmask 1044484
        %v911 = vsel %vm910, %v880, %v909
        %vm912 = vcmask 1045509
        %v913 = vsel %vm912, %v882, %v911
        %vm914 = vcmask 1046534
        %v915 = vsel %vm914, %v884, %v913
        %vm916 = vcmask 1047559
        %v917 = vsel %vm916, %v886, %v915
        %v918 = vsel %vm904, %v875, %v873
        %v919 = vsel %vm906, %v877, %v918
        %v920 = vsel %vm908, %v879, %v919
        %v921 = vsel %vm910, %v881, %v920
        %v922 = vsel %vm912, %v883, %v921
        %v923 = vsel %vm914, %v885, %v922
        %v924 = vsel %vm916, %v887, %v923
        %927 = vst [vmem:[%s394] sm:$0xff] %v917
        %928 = vst [vmem:[%s394 + $0x8] sm:$0xff] %v924
        %s929 = sand.u32 %s176, 1
        %s930 = scalar_lea.sflag [#allocation5], %s929
        %s931 = sand.u32 %s176, 1
        %s932 = smul.addr %s931, 128
        %s933 = scalar_lea.vmem [#allocation4], %s932
        %s934 = sand.u32 %s204, 1
        %s935 = scalar_lea.sflag [#allocation7], %s934
        %s936 = sand.u32 %s204, 1
        %s937 = smul.addr %s936, 16
        %s938 = scalar_lea.vmem [#allocation6], %s937
        // Predicated region
        $region87: #{_encoder_forward.1} parent=77 // pred_check
          %p939 = pneg %p186
        $region88: #{_encoder_forward.1} parent=77 // pred_check_branch
          %941 = sbr.rel (%p939) target = $region90
        $region89: #{_encoder_forward.1} parent=77 // pred_region
          %s942 = smul.u32 8, %s28
          %s943 = smul.u32 2, %s29
          %s945 = ssub.s32 2048, 2048
          %946 = vsyncadd %s930, %s945
          %s947 = smul.addr %s942, 4
          %s948 = sadd.s32 %s943, %s947
          %s949 = smul.addr %s948, 128
          %s950 = scalar_lea.hbm %s5, %s949
          %s951 = sshll.u32 %s933, 4
          %s952 = int_to_ptr.vmem [resolvable:$true] %s951
          %957 = dma.vmem_to_hbm [thread:$0]  %s952, 2048, %s950, %s930, 256, 512, 16
        $region90: #{_encoder_forward.1} parent=77 // pred_fallthru
          _
        // Predicated region
        $region91: #{_encoder_forward.1} parent=77 // pred_check
          %p958 = pneg %p214
        $region92: #{_encoder_forward.1} parent=77 // pred_check_branch
          %960 = sbr.rel (%p958) target = $region94
        $region93: #{_encoder_forward.1} parent=77 // pred_region
          %s961 = smul.u32 2, %s29
          %s963 = ssub.s32 256, 256
          %964 = vsyncadd %s935, %s963
          %s965 = smul.addr %s28, 4
          %s966 = sadd.s32 %s961, %s965
          %s967 = smul.addr %s966, 128
          %s968 = scalar_lea.hbm %s6, %s967
          %s970 = sshll.u32 %s938, 4
          %s971 = int_to_ptr.vmem [resolvable:$true] %s970
          %973 = dma.vmem_to_hbm [thread:$0]  %s971, 256, %s968, %s935
        $region94: #{_encoder_forward.1} parent=77 // pred_fallthru
          _
      $region78: #{_encoder_forward.1} parent=5 // pred_fallthru
        _
      %p974 = scmp.le.s32.totalorder 2, %s19
      // Predicated region
      $region95: #{_encoder_forward.1} parent=5 // pred_check
        %p975 = pneg %p974
      $region96: #{_encoder_forward.1} parent=5 // pred_check_branch
        %977 = sbr.rel (%p975) target = $region98
      $region97: #{_encoder_forward.1} parent=5 // pred_region
        %s978 = ssub.s32 %s19, 2
        // Predicated region
        $region99: #{_encoder_forward.1} parent=97 // pred_check
          %p979 = pneg %p192
        $region100: #{_encoder_forward.1} parent=97 // pred_check_branch
          %981 = sbr.rel (%p979) target = $region102
        $region101: #{_encoder_forward.1} parent=97 // pred_region
          %s982 = sand.u32 %s177, 1
          %s983 = scalar_lea.sflag [#allocation5], %s982
          %s984 = sand.u32 %s177, 1
          %s985 = smul.addr %s984, 128
          %s986 = scalar_lea.vmem [#allocation4], %s985
          %987 = dma.done %s983, 2048
        $region102: #{_encoder_forward.1} parent=97 // pred_fallthru
          _
        // Predicated region
        $region103: #{_encoder_forward.1} parent=97 // pred_check
          %p988 = pneg %p220
        $region104: #{_encoder_forward.1} parent=97 // pred_check_branch
          %990 = sbr.rel (%p988) target = $region106
        $region105: #{_encoder_forward.1} parent=97 // pred_region
          %s991 = sand.u32 %s205, 1
          %s992 = scalar_lea.sflag [#allocation7], %s991
          %s993 = sand.u32 %s205, 1
          %s994 = smul.addr %s993, 16
          %s995 = scalar_lea.vmem [#allocation6], %s994
          %996 = dma.done %s992, 256
        $region106: #{_encoder_forward.1} parent=97 // pred_fallthru
          _
      $region98: #{_encoder_forward.1} parent=5 // pred_fallthru
        _
    $region6: #{_encoder_forward.1} parent=1 // loop_footer
      %s23 = sadd.s32 1, %s19
    $region7: #{_encoder_forward.1} parent=1 // loop_footer_branch
      %18 = sbr.rel target = $region3
    $region8: #{_encoder_forward.1} parent=1 // loop_exit
      _
    %997 = vsyncpa [#allocation5], 1
    %s998 = scalar_lea.sflag [#allocation5], 1
    %999 = vsyncpa %s998, 1
    %1000 = vsyncpa [#allocation7], 1
    %s1001 = scalar_lea.sflag [#allocation7], 1
    %1002 = vsyncpa %s1001, 1

</llo_original>
